<compile_context>
chip_gen: v6e
topology: v6e:2x2x1
jax: 0.10.0
libtpu: 0.0.40
codegen_flags: <defaults>
</compile_context>

<pallas_src>
import functools
import math

import jax
import jax.numpy as jnp
from jax.experimental import pallas as pl
from jax.experimental.pallas import tpu as pltpu


# ---------------------------------------------------------------------------
# Kernel 1: embedding gather (DMA row-gather) fused with positional encoding.
# ---------------------------------------------------------------------------
def _embed_pe_kernel(ids_ref, pos_ref, row_ref, pe_ref, out_ref):
    # ids_ref / pos_ref are SMEM scalar-prefetch refs; they only drive the
    # data-dependent index_maps below, the body is a pure row copy + add.
    del ids_ref, pos_ref
    out_ref[...] = row_ref[...] + pe_ref[...]


def embed_and_encode(token_ids, embed_table, pos_table):
    """token_ids (B,S) int32, embed_table (V,D), pos_table (max_len,D) -> (B,S,D)."""
    b, s = token_ids.shape
    v, d = embed_table.shape
    t = b * s

    ids = token_ids.reshape(t).astype(jnp.int32)
    pos = jnp.tile(jnp.arange(s, dtype=jnp.int32), (b,))

    table3 = embed_table.reshape(v, 1, d)            # rows stay in HBM
    pe3 = pos_table.reshape(pos_table.shape[0], 1, d)

    out = pl.pallas_call(
        _embed_pe_kernel,
        out_shape=jax.ShapeDtypeStruct((t, 1, d), jnp.float32),
        grid_spec=pltpu.PrefetchScalarGridSpec(
            num_scalar_prefetch=2,          # ids, pos live in SMEM
            grid=(t,),
            in_specs=[
                # one embedding row per step, gathered straight from HBM
                pl.BlockSpec((1, 1, d), lambda i, ids, pos: (ids[i], 0, 0)),
                # matching positional-encoding row
                pl.BlockSpec((1, 1, d), lambda i, ids, pos: (pos[i], 0, 0)),
            ],
            out_specs=pl.BlockSpec((1, 1, d), lambda i, ids, pos: (i, 0, 0)),
        ),
        compiler_params=pltpu.CompilerParams(
            dimension_semantics=("arbitrary",)),
    )(ids, pos, table3, pe3)
    return out.reshape(b, s, d)


# ---------------------------------------------------------------------------
# Kernel 2: fused MultiHeadAttention sub-block (proj + attention + out-proj)
#           + the DecoderLayer's  x = a + LayerNorm(a)  residual.
# ---------------------------------------------------------------------------
def _mha_ln_kernel(xq_ref, xkv_ref, mask_ref, wq_ref, bq_ref, wo_ref, bo_ref,
                   ga_ref, gb_ref, out_ref, *, n_heads, scale, same_kv, eps):
    xq = xq_ref[0]                                          # (Sq, D)
    wq = wq_ref[...]                                        # (D, D)  (= W_q^T)
    bq = bq_ref[...]                                        # (1, D)
    q = jnp.dot(xq, wq, preferred_element_type=jnp.float32) + bq
    if same_kv:
        kv = q                                              # self-attn: q==k==v proj
    else:
        kv = jnp.dot(xkv_ref[0], wq,
                     preferred_element_type=jnp.float32) + bq
    msk = mask_ref[0]                                       # (Sq, Sk)
    d = q.shape[-1]
    dk = d // n_heads

    acc = None
    for h in range(n_heads):                                # static unroll over heads
        qh = q[:, h * dk:(h + 1) * dk]                      # (Sq, dk)
        kh = kv[:, h * dk:(h + 1) * dk]                     # (Sk, dk) ; v == k
        s = jax.lax.dot_general(qh, kh, (((1,), (1,)), ((), ())),
                                preferred_element_type=jnp.float32) * scale
        s = jnp.where(msk == 0, -1000000000.0, s)           # masked_fill(mask==0,-1e9)
        w = jax.nn.softmax(s, axis=-1)
        hv = jnp.dot(w, kh, preferred_element_type=jnp.float32)        # (Sq, dk)
        # accumulate the output projection per head (avoids a lane concat):
        contrib = jnp.dot(hv, wo_ref[h * dk:(h + 1) * dk, :],
                          preferred_element_type=jnp.float32)           # (Sq, D)
        acc = contrib if acc is None else acc + contrib
    a = acc + bo_ref[...]                                   # MHA output (Sq, D)

    # fused residual:  x = a + LayerNorm(a)   (unbiased std, eps on std)
    mu = jnp.mean(a, axis=-1, keepdims=True)
    xc = a - mu
    var = jnp.sum(xc * xc, axis=-1, keepdims=True) / (d - 1)
    ln = ga_ref[...] * (xc / (jnp.sqrt(var) + eps)) + gb_ref[...]
    out_ref[0] = a + ln


def multi_head_attention_block(q_in, kv_in, mask, p, ln_a, ln_b, *,
                               same_kv, eps=1e-6):
    """Fused MHA sub-block: returns  a + LayerNorm(a)  with a = MHA(q_in, kv_in)."""
    b, sq, d = q_in.shape
    sk = kv_in.shape[1]
    h = p["n_heads"]
    dk = d // h
    scale = 1.0 / math.sqrt(dk)
    mask_b = jnp.broadcast_to(mask, (b, sq, sk)).astype(jnp.float32)

    wq_t = p["wq"].T                                        # (D, D)
    wo_t = p["wo"].T                                        # (D, D)
    bq2 = p["bq"].reshape(1, d)
    bo2 = p["bo"].reshape(1, d)
    ga2 = ln_a.reshape(1, d)
    gb2 = ln_b.reshape(1, d)

    return pl.pallas_call(
        functools.partial(_mha_ln_kernel, n_heads=h, scale=scale,
                          same_kv=same_kv, eps=eps),
        out_shape=jax.ShapeDtypeStruct((b, sq, d), jnp.float32),
        grid_spec=pltpu.PrefetchScalarGridSpec(
            num_scalar_prefetch=0,
            grid=(b,),
            in_specs=[
                pl.BlockSpec((1, sq, d), lambda bi: (bi, 0, 0)),
                pl.BlockSpec((1, sk, d), lambda bi: (bi, 0, 0)),
                pl.BlockSpec((1, sq, sk), lambda bi: (bi, 0, 0)),
                pl.BlockSpec((d, d), lambda bi: (0, 0)),
                pl.BlockSpec((1, d), lambda bi: (0, 0)),
                pl.BlockSpec((d, d), lambda bi: (0, 0)),
                pl.BlockSpec((1, d), lambda bi: (0, 0)),
                pl.BlockSpec((1, d), lambda bi: (0, 0)),
                pl.BlockSpec((1, d), lambda bi: (0, 0)),
            ],
            out_specs=pl.BlockSpec((1, sq, d), lambda bi: (bi, 0, 0)),
        ),
        compiler_params=pltpu.CompilerParams(
            dimension_semantics=("parallel",)),
    )(q_in, kv_in, mask_b, wq_t, bq2, wo_t, bo2, ga2, gb2)


# ---------------------------------------------------------------------------
# Kernel 3: fused FeedForward sub-block + residual LayerNorm.
#           out = f + LN(f),  f = relu(x @ W1^T + b1) @ W2^T + b2.
# ---------------------------------------------------------------------------
def _ff_ln_kernel(x_ref, w1_ref, b1_ref, w2_ref, b2_ref, ga_ref, gb_ref,
                  out_ref, *, eps):
    x = x_ref[...]                                          # (tm, D)
    h = jnp.dot(x, w1_ref[...], preferred_element_type=jnp.float32) + b1_ref[...]
    h = jnp.maximum(h, 0.0)                                 # fused ReLU; dropout = id
    f = jnp.dot(h, w2_ref[...], preferred_element_type=jnp.float32) + b2_ref[...]
    d = f.shape[-1]
    mu = jnp.mean(f, axis=-1, keepdims=True)
    xc = f - mu
    var = jnp.sum(xc * xc, axis=-1, keepdims=True) / (d - 1)   # torch.std default
    ln = ga_ref[...] * (xc / (jnp.sqrt(var) + eps)) + gb_ref[...]
    out_ref[...] = f + ln


def _pick_row_tile(m):
    if m <= 1024:
        return m
    for c in (1024, 512, 256, 128, 64, 32, 16, 8):
        if m % c == 0:
            return c
    return m


def feed_forward_block(x, p, ln_a, ln_b, *, eps=1e-6):
    *lead, d = x.shape
    d_ff = p["ff_w1"].shape[0]
    m = math.prod(lead)
    x2 = x.reshape(m, d)
    w1_t = p["ff_w1"].T                                     # (D, d_ff)
    w2_t = p["ff_w2"].T                                     # (d_ff, D)
    b1_2 = p["ff_b1"].reshape(1, d_ff)
    b2_2 = p["ff_b2"].reshape(1, d)
    ga2 = ln_a.reshape(1, d)
    gb2 = ln_b.reshape(1, d)
    t_tile = _pick_row_tile(m)

    out = pl.pallas_call(
        functools.partial(_ff_ln_kernel, eps=eps),
        out_shape=jax.ShapeDtypeStruct((m, d), jnp.float32),
        grid_spec=pltpu.PrefetchScalarGridSpec(
            num_scalar_prefetch=0,
            grid=(m // t_tile,),
            in_specs=[
                pl.BlockSpec((t_tile, d), lambda i: (i, 0)),
                pl.BlockSpec((d, d_ff), lambda i: (0, 0)),
                pl.BlockSpec((1, d_ff), lambda i: (0, 0)),
                pl.BlockSpec((d_ff, d), lambda i: (0, 0)),
                pl.BlockSpec((1, d), lambda i: (0, 0)),
                pl.BlockSpec((1, d), lambda i: (0, 0)),
                pl.BlockSpec((1, d), lambda i: (0, 0)),
            ],
            out_specs=pl.BlockSpec((t_tile, d), lambda i: (i, 0)),
        ),
        compiler_params=pltpu.CompilerParams(
            dimension_semantics=("parallel",)),
    )(x2, w1_t, b1_2, w2_t, b2_2, ga2, gb2)
    return out.reshape(*lead, d)


# ---------------------------------------------------------------------------
# Kernel 4: the module's custom LayerNorm (unbiased std) — final norm only.
# ---------------------------------------------------------------------------
def _layernorm_kernel(x_ref, a_ref, b_ref, out_ref, *, eps):
    x = x_ref[...]                                          # (t_tile, D)
    d = x.shape[-1]
    mu = jnp.mean(x, axis=-1, keepdims=True)
    xc = x - mu
    var = jnp.sum(xc * xc, axis=-1, keepdims=True) / (d - 1)
    out_ref[...] = a_ref[...] * (xc / (jnp.sqrt(var) + eps)) + b_ref[...]


def layer_norm(x, alpha, beta, *, eps=1e-6):
    *lead, d = x.shape
    m = math.prod(lead)
    x2 = x.reshape(m, d)
    a2 = alpha.reshape(1, d)
    b2 = beta.reshape(1, d)
    t_tile = _pick_row_tile(m)

    out = pl.pallas_call(
        functools.partial(_layernorm_kernel, eps=eps),
        out_shape=jax.ShapeDtypeStruct((m, d), jnp.float32),
        grid_spec=pltpu.PrefetchScalarGridSpec(
            num_scalar_prefetch=0,
            grid=(m // t_tile,),
            in_specs=[
                pl.BlockSpec((t_tile, d), lambda i: (i, 0)),
                pl.BlockSpec((1, d), lambda i: (0, 0)),
                pl.BlockSpec((1, d), lambda i: (0, 0)),
            ],
            out_specs=pl.BlockSpec((t_tile, d), lambda i: (i, 0)),
        ),
        compiler_params=pltpu.CompilerParams(
            dimension_semantics=("parallel",)),
    )(x2, a2, b2)
    return out.reshape(*lead, d)


# ---------------------------------------------------------------------------
# Module-level composition (DecoderLayer / Decoder).
# ---------------------------------------------------------------------------
def decoder_layer(x, enc_out, src_mask, trg_mask, p):
    # TODO(synk): dropout layers are treated as identity (eval mode); stochastic dropout not implemented.
    # Self-attention sub-block (q,k,v all = x and all share the q-projection).
    x = multi_head_attention_block(x, x, trg_mask, p["mha1"],
                                   p["ln1_a"], p["ln1_b"], same_kv=True)
    # Cross-attention sub-block (k,v = encoder output, still via the q-projection).
    x = multi_head_attention_block(x, enc_out, src_mask, p["mha2"],
                                   p["ln2_a"], p["ln2_b"], same_kv=False)
    # Feed-forward sub-block.
    x = feed_forward_block(x, p, p["ln3_a"], p["ln3_b"])
    return x


def decoder_forward(trg_ids, enc_out, src_mask, trg_mask, params):
    x = embed_and_encode(trg_ids, params["embed_table"], params["pe"])
    for p in params["layers"]:
        x = decoder_layer(x, enc_out, src_mask, trg_mask, p)
    return layer_norm(x, params["ln_a"], params["ln_b"])


# ---------------------------------------------------------------------------
# Parameter construction (PyTorch-style init) + pure-JAX reference.
# ---------------------------------------------------------------------------
def make_positional_encoding(max_len, d):
    den = jnp.exp(-jnp.arange(0, d, 2, dtype=jnp.float32) * math.log(1000.0) / d)
    pos = jnp.arange(max_len, dtype=jnp.float32).reshape(max_len, 1)
    pe = jnp.zeros((max_len, d), dtype=jnp.float32)
    pe = pe.at[:, 1::2].set(jnp.cos(pos * den))
    pe = pe.at[:, 0::2].set(jnp.sin(pos * den))
    return pe


def init_linear(key, fan_in, fan_out):
    k1, k2 = jax.random.split(key)
    bound = 1.0 / math.sqrt(fan_in)
    w = jax.random.uniform(k1, (fan_out, fan_in), jnp.float32, -bound, bound)
    b = jax.random.uniform(k2, (fan_out,), jnp.float32, -bound, bound)
    return w, b


def init_decoder_params(key, vocab, dm, n_heads, n_layers, d_ff, max_len):
    keys = jax.random.split(key, 2 + n_layers)
    embed_table = jax.random.normal(keys[0], (vocab, dm), jnp.float32)  # nn.Embedding ~ N(0,1)
    layers = []
    for li in range(n_layers):
        lk = jax.random.split(keys[2 + li], 6)
        wq1, bq1 = init_linear(lk[0], dm, dm)
        wo1, bo1 = init_linear(lk[1], dm, dm)
        wq2, bq2 = init_linear(lk[2], dm, dm)
        wo2, bo2 = init_linear(lk[3], dm, dm)
        w1, b1 = init_linear(lk[4], dm, d_ff)
        w2, b2 = init_linear(lk[5], d_ff, dm)
        layers.append(dict(
            mha1=dict(wq=wq1, bq=bq1, wo=wo1, bo=bo1, n_heads=n_heads),
            mha2=dict(wq=wq2, bq=bq2, wo=wo2, bo=bo2, n_heads=n_heads),
            ff_w1=w1, ff_b1=b1, ff_w2=w2, ff_b2=b2,
            ln1_a=jnp.ones(dm), ln1_b=jnp.zeros(dm),
            ln2_a=jnp.ones(dm), ln2_b=jnp.zeros(dm),
            ln3_a=jnp.ones(dm), ln3_b=jnp.zeros(dm),
        ))
    return dict(embed_table=embed_table, pe=make_positional_encoding(max_len, dm),
                layers=layers, ln_a=jnp.ones(dm), ln_b=jnp.zeros(dm))


def _reference_forward(trg, enc_out, src_mask, trg_mask, params):
    """Pure-JAX mirror of the PyTorch Decoder.forward (eval mode)."""
    def ln(x, a, bt, eps=1e-6):
        mu = x.mean(-1, keepdims=True)
        xc = x - mu
        std = jnp.sqrt(jnp.sum(xc * xc, -1, keepdims=True) / (x.shape[-1] - 1))
        return a * (xc / (std + eps)) + bt

    def mha(q, k, v, mask, p):
        b, sq, dm = q.shape
        sk = k.shape[1]
        h = p["n_heads"]
        dk = dm // h
        def proj(t):
            y = t @ p["wq"].T + p["bq"]
            return y.reshape(t.shape[0], t.shape[1], h, dk).transpose(0, 2, 1, 3)
        qh, kh, vh = proj(q), proj(k), proj(v)
        s = jnp.einsum("bhqd,bhkd->bhqk", qh, kh) / math.sqrt(dk)
        m = jnp.broadcast_to(mask, (b, sq, sk))[:, None]
        s = jnp.where(m == 0, -1000000000.0, s)
        w = jax.nn.softmax(s, -1)
        o = jnp.einsum("bhqk,bhkd->bhqd", w, vh)
        o = o.transpose(0, 2, 1, 3).reshape(b, sq, h * dk)
        return o @ p["wo"].T + p["bo"]

    s_len = trg.shape[1]
    x = params["embed_table"][trg] + params["pe"][:s_len][None]
    for p in params["layers"]:
        a1 = mha(x, x, x, trg_mask, p["mha1"])
        x = a1 + ln(a1, p["ln1_a"], p["ln1_b"])
        a2 = mha(x, enc_out, enc_out, src_mask, p["mha2"])
        x = a2 + ln(a2, p["ln2_a"], p["ln2_b"])
        f = jnp.maximum(x @ p["ff_w1"].T + p["ff_b1"], 0.0) @ p["ff_w2"].T + p["ff_b2"]
        x = f + ln(f, p["ln3_a"], p["ln3_b"])
    return ln(x, params["ln_a"], params["ln_b"])


# ---------------------------------------------------------------------------
if __name__ == "__main__":
    # Keep reference and kernel matmuls in full f32 for a tight comparison.
    jax.config.update("jax_default_matmul_precision", "highest")

    # Small shapes consistent with the module structure.
    vocab_size = 64
    dm = 128            # lane-dense d_model (multiple of 128)
    heads = 4
    n_layers = 2
    d_ff = 512
    batch, seq_trg, seq_src = 2, 8, 8
    max_seq_len = 80

    key = jax.random.PRNGKey(0)
    k_par, k_trg, k_enc = jax.random.split(key, 3)

    params = init_decoder_params(k_par, vocab_size, dm, heads, n_layers, d_ff,
                                 max_seq_len)
    trg = jax.random.randint(k_trg, (batch, seq_trg), 0, vocab_size,
                             dtype=jnp.int32)
    enc_out = jax.random.normal(k_enc, (batch, seq_src, dm), jnp.float32)

    # Causal target mask and a padding-style source mask.
    trg_mask = jnp.tril(jnp.ones((1, seq_trg, seq_trg), jnp.float32))
    src_mask = jnp.ones((batch, 1, seq_src), jnp.float32)
    src_mask = src_mask.at[1, 0, seq_src - 1].set(0.0)

    out = decoder_forward(trg, enc_out, src_mask, trg_mask, params)
    out = jax.block_until_ready(out)

    ref = _reference_forward(trg, enc_out, src_mask, trg_mask, params)
    assert out.shape == (batch, seq_trg, dm)
    assert bool(jnp.isfinite(out).all())
    max_err = float(jnp.max(jnp.abs(out - ref)))
    assert jnp.allclose(out, ref, atol=1e-2, rtol=1e-2), f"max abs err {max_err}"

    print("KERNEL_OK")
</pallas_src>

<mosaic_0001>
module attributes {stable_mosaic.version = 11 : i64} {
  func.func @_embed_pe_kernel(%arg0: i32, %arg1: memref<16xi32, #tpu.memory_space<smem>>, %arg2: memref<16xi32, #tpu.memory_space<smem>>, %arg3: memref<1x1x128xf32, #tpu.memory_space<vmem>>, %arg4: memref<1x1x128xf32, #tpu.memory_space<vmem>>, %arg5: memref<1x1x128xf32, #tpu.memory_space<vmem>>) attributes {dimension_semantics = [#tpu.dimension_semantics<arbitrary>], iteration_bounds = array<i64: 16>, scalar_prefetch = 2 : i64, scratch_operands = 0 : i64, tpu.core_type = #tpu.core_type<tc>, window_params = [{transform_indices = @transform_0, window_bounds = array<i64: 1, 1, 128>}, {transform_indices = @transform_1, window_bounds = array<i64: 1, 1, 128>}, {transform_indices = @transform_2, window_bounds = array<i64: 1, 1, 128>}]} {
    %c0 = arith.constant 0 : index
    %c0_0 = arith.constant 0 : index
    %c0_1 = arith.constant 0 : index
    %0 = vector.load %arg3[%c0, %c0_0, %c0_1] : memref<1x1x128xf32, #tpu.memory_space<vmem>>, vector<1x1x128xf32>
    %c0_2 = arith.constant 0 : index
    %c0_3 = arith.constant 0 : index
    %c0_4 = arith.constant 0 : index
    %1 = vector.load %arg4[%c0_2, %c0_3, %c0_4] : memref<1x1x128xf32, #tpu.memory_space<vmem>>, vector<1x1x128xf32>
    %2 = arith.addf %0, %1 : vector<1x1x128xf32>
    %c0_5 = arith.constant 0 : index
    %c0_6 = arith.constant 0 : index
    %c0_7 = arith.constant 0 : index
    %3 = vector.load %arg5[%c0_5, %c0_6, %c0_7] : memref<1x1x128xf32, #tpu.memory_space<vmem>>, vector<1x1x128xf32>
    tpu.vector_store %arg5[%c0_5, %c0_6, %c0_7], %2 {strides = array<i32>} : memref<1x1x128xf32, #tpu.memory_space<vmem>>, vector<1x1x128xf32>,
    return
  }
  func.func @transform_0(%arg0: i32, %arg1: memref<16xi32, #tpu.memory_space<smem>>, %arg2: memref<16xi32, #tpu.memory_space<smem>>) -> (i32, i32, i32) {
    %0 = arith.index_cast %arg0 : i32 to index
    %1 = memref.load %arg1[%0] : memref<16xi32, #tpu.memory_space<smem>>
    %c0_i32 = arith.constant 0 : i32
    %c0_i32_0 = arith.constant 0 : i32
    %c0_i32_1 = arith.constant 0 : i32
    return %1, %c0_i32, %c0_i32_0 : i32, i32, i32
  }
  func.func @transform_1(%arg0: i32, %arg1: memref<16xi32, #tpu.memory_space<smem>>, %arg2: memref<16xi32, #tpu.memory_space<smem>>) -> (i32, i32, i32) {
    %0 = arith.index_cast %arg0 : i32 to index
    %1 = memref.load %arg2[%0] : memref<16xi32, #tpu.memory_space<smem>>
    %c0_i32 = arith.constant 0 : i32
    %c0_i32_0 = arith.constant 0 : i32
    %c0_i32_1 = arith.constant 0 : i32
    return %1, %c0_i32, %c0_i32_0 : i32, i32, i32
  }
  func.func @transform_2(%arg0: i32, %arg1: memref<16xi32, #tpu.memory_space<smem>>, %arg2: memref<16xi32, #tpu.memory_space<smem>>) -> (i32, i32, i32) {
    %c0_i32 = arith.constant 0 : i32
    %c0_i32_0 = arith.constant 0 : i32
    %c0_i32_1 = arith.constant 0 : i32
    return %arg0, %c0_i32, %c0_i32_0 : i32, i32, i32
  }
}

</mosaic_0001>

<llo_original>
// kernel: tpu_custom_call.1
$region0: #{tpu_custom_call.1}
  #allocation0 [shape = 'u32[]', space=smem, size = 0x4, offset = 0x4, fixed_abs, tag = 'smem constant byte address 0x4 - core index']
  #allocation1 [shape = 'u32[144,128]{1,0:T(1,128)}', space=vmem, size = 0x12000, scoped, tag = 'internal scratch']
  #allocation2 [shape = 's32[1]{0}', space=sflag, size = 0x4, scoped, tag = 'scoped memory for tpu_custom_call.1']
  #allocation3 [shape = 'u8[512]{0}', space=smem, size = 0x200, scoped, tag = 'prefetched SMEM operand 0']
  #allocation4 [shape = 'u8[512]{0}', space=smem, size = 0x200, scoped, tag = 'prefetched SMEM operand 1']
  %s0 = inlined_call_operand.hbm [shape: s32[16], index: 0, kind: input, shape index: {}]
  %s1 = inlined_call_operand.vmem [shape: s32[16], index: 1, kind: input, shape index: {}]
  %s2 = inlined_call_operand.hbm [shape: f32[64,1,128], index: 2, kind: input, shape index: {}]
  %s3 = inlined_call_operand.hbm [shape: f32[80,1,128], index: 3, kind: input, shape index: {}]
  %s4 = inlined_call_operand.hbm [shape: f32[16,1,128], index: 4, kind: output, shape index: {}]
  %s5 = sld [smem:[#allocation0]]
  $region49: #{tpu_custom_call.1} parent=0
    _
  %s7 = ssub.s32 1, %s5
  %s8 = scalar_select 0, %s7, %s5
  %10 = dma.hbm_to_smem %s0, 16, [#allocation3], [#allocation2]
  %s11 = sshll.u32 %s1, 4
  %s12 = int_to_ptr.vmem [resolvable:$true] %s11
  %14 = dma.vmem_to_smem %s12, 16, [#allocation4], [#allocation2]
  %15 = dma.done [#allocation2], 32
  %16 = sfence
  $region1: #{tpu_custom_call.1} parent=0
    #allocation5 [shape = 'u8[1024]{0}', space=vmem, size = 0x400, scoped, tag = 'input window, operand 2']
    #allocation6 [shape = 's32[2]{0}', space=sflag, size = 0x8, scoped, tag = 'scoped memory for tpu_custom_call.1']
    #allocation7 [shape = 's32[2]{0}', space=sflag, size = 0x8, scoped, tag = 'scoped memory for tpu_custom_call.1']
    #allocation8 [shape = 'u8[1024]{0}', space=vmem, size = 0x400, scoped, tag = 'input window, operand 3']
    #allocation9 [shape = 's32[2]{0}', space=sflag, size = 0x8, scoped, tag = 'scoped memory for tpu_custom_call.1']
    #allocation10 [shape = 'u8[1024]{0}', space=vmem, size = 0x400, scoped, tag = 'output window, operand 0']
    %17 = vsyncpa [#allocation6], 0
    %s18 = scalar_lea.sflag [#allocation6], 1
    %19 = vsyncpa %s18, 0
    %20 = vsyncpa [#allocation9], 0
    %s21 = scalar_lea.sflag [#allocation9], 1
    %22 = vsyncpa %s21, 0
    %23 = vsyncpa [#allocation7], 0
    %s24 = scalar_lea.sflag [#allocation7], 1
    %25 = vsyncpa %s24, 0
    loop: start=0, step=1, limit=18
    $region2: #{tpu_custom_call.1} parent=1 // loop_pre_header
      _
    $region3: #{tpu_custom_call.1} parent=1 // loop_header
      %s27 = sphi 0, %s31
      %p28 = scmp.ge.s32.totalorder %s27, 18
      %s39 = sphi 0, %s41
      %s42 = sphi 0, %s39
      %s43 = sphi 0, %s42
      %s59 = sphi 0, %s43
      %s67 = sphi 0, %s69
      %s70 = sphi 0, %s67
      %s71 = sphi 0, %s70
      %s87 = sphi 0, %s71
      %s93 = sphi 0, %s95
      %s96 = sphi 0, %s93
      %s97 = sphi 0, %s96
      %s113 = sphi 0, %s97
    $region4: #{tpu_custom_call.1} parent=1 // loop_header_branch
      %30 = sbr.rel (%p28) target = $region8
    $region5: #{tpu_custom_call.1} parent=1 // loop_body
      %s32 = ssub.s32 %s27, 1
      %s33 = ssub.s32 %s27, 2
      %s34 = sadd.s32 %s27, 1
      %s35 = sld [smem:[#allocation3 + %s27]]
      %s36 = sld [smem:[#allocation3 + %s34]]
      %s37 = ssub.s32 %s35, %s36
      %p38 = scmp.eq.s32.totalorder %s37, 0
      %s40 = sadd.s32 %s39, 1
      %s41 = scalar_select %p38, %s39, %s40
      %p44 = pneg %p38
      %p45 = scmp.eq.s32.totalorder %s27, 15
      %p46 = por %p44, %p45
      %p47 = scmp.ne.s32.totalorder %s39, %s42
      %p48 = scmp.eq.s32.totalorder %s27, 0
      %p49 = por %p47, %p48
      %p50 = scmp.ne.s32.totalorder %s39, %s42
      %p51 = scmp.eq.s32.totalorder %s32, 15
      %p52 = por %p50, %p51
      %p53 = scmp.ne.s32.totalorder %s42, %s43
      %p54 = scmp.eq.s32.totalorder %s32, 0
      %p55 = por %p53, %p54
      %p56 = scmp.ne.s32.totalorder %s42, %s43
      %p57 = scmp.eq.s32.totalorder %s33, 15
      %p58 = por %p56, %p57
      %p60 = scmp.ne.s32.totalorder %s43, %s59
      %p61 = scmp.eq.s32.totalorder %s33, 0
      %p62 = por %p60, %p61
      %s63 = sld [smem:[#allocation4 + %s27]]
      %s64 = sld [smem:[#allocation4 + %s34]]
      %s65 = ssub.s32 %s63, %s64
      %p66 = scmp.eq.s32.totalorder %s65, 0
      %s68 = sadd.s32 %s67, 1
      %s69 = scalar_select %p66, %s67, %s68
      %p72 = pneg %p66
      %p73 = scmp.eq.s32.totalorder %s27, 15
      %p74 = por %p72, %p73
      %p75 = scmp.ne.s32.totalorder %s67, %s70
      %p76 = scmp.eq.s32.totalorder %s27, 0
      %p77 = por %p75, %p76
      %p78 = scmp.ne.s32.totalorder %s67, %s70
      %p79 = scmp.eq.s32.totalorder %s32, 15
      %p80 = por %p78, %p79
      %p81 = scmp.ne.s32.totalorder %s70, %s71
      %p82 = scmp.eq.s32.totalorder %s32, 0
      %p83 = por %p81, %p82
      %p84 = scmp.ne.s32.totalorder %s70, %s71
      %p85 = scmp.eq.s32.totalorder %s33, 15
      %p86 = por %p84, %p85
      %p88 = scmp.ne.s32.totalorder %s71, %s87
      %p89 = scmp.eq.s32.totalorder %s33, 0
      %p90 = por %p88, %p89
      %s91 = ssub.s32 %s27, %s34
      %p92 = scmp.eq.s32.totalorder %s91, 0
      %s94 = sadd.s32 %s93, 1
      %s95 = scalar_select %p92, %s93, %s94
      %p98 = pneg %p92
      %p99 = scmp.eq.s32.totalorder %s27, 15
      %p100 = por %p98, %p99
      %p101 = scmp.ne.s32.totalorder %s93, %s96
      %p102 = scmp.eq.s32.totalorder %s27, 0
      %p103 = por %p101, %p102
      %p104 = scmp.ne.s32.totalorder %s93, %s96
      %p105 = scmp.eq.s32.totalorder %s32, 15
      %p106 = por %p104, %p105
      %p107 = scmp.ne.s32.totalorder %s96, %s97
      %p108 = scmp.eq.s32.totalorder %s32, 0
      %p109 = por %p107, %p108
      %p110 = scmp.ne.s32.totalorder %s96, %s97
      %p111 = scmp.eq.s32.totalorder %s33, 15
      %p112 = por %p110, %p111
      %p114 = scmp.ne.s32.totalorder %s97, %s113
      %p115 = scmp.eq.s32.totalorder %s33, 0
      %p116 = por %p114, %p115
      %p117 = scmp.le.s32.totalorder 1, %s27
      %p118 = scmp.lt.s32.totalorder %s27, 17
      %p119 = pnand %p117, %p118
      %p120 = pneg %p119
      // Predicated region
      $region9: #{tpu_custom_call.1} parent=5 // pred_check
        _
      $region10: #{tpu_custom_call.1} parent=5 // pred_check_branch
        %122 = sbr.rel (%p119) target = $region12
      $region11: #{tpu_custom_call.1} parent=5 // pred_region
        %s123 = ssub.s32 %s27, 1
      $region12: #{tpu_custom_call.1} parent=5 // pred_fallthru
        _
      %p124 = scmp.lt.s32.totalorder %s27, 16
      // Predicated region
      $region13: #{tpu_custom_call.1} parent=5 // pred_check
        %p125 = pneg %p124
      $region14: #{tpu_custom_call.1} parent=5 // pred_check_branch
        %127 = sbr.rel (%p125) target = $region16
      $region15: #{tpu_custom_call.1} parent=5 // pred_region
        // Predicated region
        $region17: #{tpu_custom_call.1} parent=15 // pred_check
          %p128 = pneg %p49
        $region18: #{tpu_custom_call.1} parent=15 // pred_check_branch
          %130 = sbr.rel (%p128) target = $region20
        $region19: #{tpu_custom_call.1} parent=15 // pred_region
          %s131 = sand.u32 %s39, 1
          %s132 = scalar_lea.sflag [#allocation6], %s131
          %s133 = sand.u32 %s39, 1
          %s134 = scalar_lea.vmem [#allocation5], %s133
          %s135 = sld [smem:[#allocation3 + %s27]]
          %s137 = ssub.s32 16, 16
          %138 = vsyncadd %s132, %s137
          %s139 = smul.addr %s135, 16
          %s140 = scalar_lea.hbm %s2, %s139
          %s142 = sshll.u32 %s134, 4
          %s143 = int_to_ptr.vmem [resolvable:$true] %s142
          %145 = dma.hbm_to_vmem [thread:$0]  %s140, 16, %s143, %s132
        $region20: #{tpu_custom_call.1} parent=15 // pred_fallthru
          _
        // Predicated region
        $region21: #{tpu_custom_call.1} parent=15 // pred_check
          %p146 = pneg %p77
        $region22: #{tpu_custom_call.1} parent=15 // pred_check_branch
          %148 = sbr.rel (%p146) target = $region24
        $region23: #{tpu_custom_call.1} parent=15 // pred_region
          %s149 = sand.u32 %s67, 1
          %s150 = scalar_lea.sflag [#allocation9], %s149
          %s151 = sand.u32 %s67, 1
          %s152 = scalar_lea.vmem [#allocation8], %s151
          %s153 = sld [smem:[#allocation4 + %s27]]
          %s155 = ssub.s32 16, 16
          %156 = vsyncadd %s150, %s155
          %s157 = smul.addr %s153, 16
          %s158 = scalar_lea.hbm %s3, %s157
          %s160 = sshll.u32 %s152, 4
          %s161 = int_to_ptr.vmem [resolvable:$true] %s160
          %163 = dma.hbm_to_vmem [thread:$0]  %s158, 16, %s161, %s150
        $region24: #{tpu_custom_call.1} parent=15 // pred_fallthru
          _
      $region16: #{tpu_custom_call.1} parent=5 // pred_fallthru
        _
      %p164 = scmp.le.s32.totalorder 1, %s27
      %p165 = scmp.lt.s32.totalorder %s27, 17
      %p166 = pnand %p164, %p165
      %p167 = pneg %p166
      // Predicated region
      $region25: #{tpu_custom_call.1} parent=5 // pred_check
        _
      $region26: #{tpu_custom_call.1} parent=5 // pred_check_branch
        %169 = sbr.rel (%p166) target = $region28
      $region27: #{tpu_custom_call.1} parent=5 // pred_region
        %s170 = ssub.s32 %s27, 1
        %s171 = sand.u32 %s42, 1
        %s172 = scalar_lea.sflag [#allocation6], %s171
        %s173 = sand.u32 %s42, 1
        %s174 = scalar_lea.vmem [#allocation5], %s173
        // Predicated region
        $region29: #{tpu_custom_call.1} parent=27 // pred_check
          %p175 = pneg %p55
        $region30: #{tpu_custom_call.1} parent=27 // pred_check_branch
          %177 = sbr.rel (%p175) target = $region32
        $region31: #{tpu_custom_call.1} parent=27 // pred_region
          %178 = dma.done %s172, 16
        $region32: #{tpu_custom_call.1} parent=27 // pred_fallthru
          _
        %s179 = sand.u32 %s70, 1
        %s180 = scalar_lea.sflag [#allocation9], %s179
        %s181 = sand.u32 %s70, 1
        %s182 = scalar_lea.vmem [#allocation8], %s181
        // Predicated region
        $region33: #{tpu_custom_call.1} parent=27 // pred_check
          %p183 = pneg %p83
        $region34: #{tpu_custom_call.1} parent=27 // pred_check_branch
          %185 = sbr.rel (%p183) target = $region36
        $region35: #{tpu_custom_call.1} parent=27 // pred_region
          %186 = dma.done %s180, 16
        $region36: #{tpu_custom_call.1} parent=27 // pred_fallthru
          _
        %s187 = sand.u32 %s42, 1
        %s188 = scalar_lea.sflag [#allocation6], %s187
        %s189 = sand.u32 %s42, 1
        %s190 = scalar_lea.vmem [#allocation5], %s189
        %p191 = pneg %p55
        %p192 = pneg %p52
        %s193 = sand.u32 %s70, 1
        %s194 = scalar_lea.sflag [#allocation9], %s193
        %s195 = sand.u32 %s70, 1
        %s196 = scalar_lea.vmem [#allocation8], %s195
        %p197 = pneg %p83
        %p198 = pneg %p80
        %p199 = pneg %p109
        %p200 = pneg %p106
        %s201 = sand.u32 %s96, 1
        %s202 = scalar_lea.sflag [#allocation7], %s201
        %s203 = sand.u32 %s96, 1
        %s204 = scalar_lea.vmem [#allocation10], %s203
        %s205 = sld [smem:[#allocation3 + %s32]]
        %s206 = sld [smem:[#allocation4 + %s32]]
        %v207 = vld [vmem:[%s174] sm:$0x1]
        %v208 = vld [vmem:[%s182] sm:$0x1]
        %v209 = vadd.f32 %v207, %v208
        %210 = vst [vmem:[%s204] sm:$0x1] %v209
        %s211 = sand.u32 %s96, 1
        %s212 = scalar_lea.sflag [#allocation7], %s211
        %s213 = sand.u32 %s96, 1
        %s214 = scalar_lea.vmem [#allocation10], %s213
        // Predicated region
        $region37: #{tpu_custom_call.1} parent=27 // pred_check
          %p215 = pneg %p106
        $region38: #{tpu_custom_call.1} parent=27 // pred_check_branch
          %217 = sbr.rel (%p215) target = $region40
        $region39: #{tpu_custom_call.1} parent=27 // pred_region
          %s219 = ssub.s32 16, 16
          %220 = vsyncadd %s212, %s219
          %s221 = smul.addr %s32, 16
          %s222 = scalar_lea.hbm %s4, %s221
          %s224 = sshll.u32 %s214, 4
          %s225 = int_to_ptr.vmem [resolvable:$true] %s224
          %227 = dma.vmem_to_hbm [thread:$0]  %s225, 16, %s222, %s212
        $region40: #{tpu_custom_call.1} parent=27 // pred_fallthru
          _
      $region28: #{tpu_custom_call.1} parent=5 // pred_fallthru
        _
      %p228 = scmp.le.s32.totalorder 2, %s27
      // Predicated region
      $region41: #{tpu_custom_call.1} parent=5 // pred_check
        %p229 = pneg %p228
      $region42: #{tpu_custom_call.1} parent=5 // pred_check_branch
        %231 = sbr.rel (%p229) target = $region44
      $region43: #{tpu_custom_call.1} parent=5 // pred_region
        %s232 = ssub.s32 %s27, 2
        // Predicated region
        $region45: #{tpu_custom_call.1} parent=43 // pred_check
          %p233 = pneg %p112
        $region46: #{tpu_custom_call.1} parent=43 // pred_check_branch
          %235 = sbr.rel (%p233) target = $region48
        $region47: #{tpu_custom_call.1} parent=43 // pred_region
          %s236 = sand.u32 %s97, 1
          %s237 = scalar_lea.sflag [#allocation7], %s236
          %s238 = sand.u32 %s97, 1
          %s239 = scalar_lea.vmem [#allocation10], %s238
          %240 = dma.done %s237, 16
        $region48: #{tpu_custom_call.1} parent=43 // pred_fallthru
          _
      $region44: #{tpu_custom_call.1} parent=5 // pred_fallthru
        _
    $region6: #{tpu_custom_call.1} parent=1 // loop_footer
      %s31 = sadd.s32 1, %s27
    $region7: #{tpu_custom_call.1} parent=1 // loop_footer_branch
      %26 = sbr.rel target = $region3
    $region8: #{tpu_custom_call.1} parent=1 // loop_exit
      _
    %241 = vsyncpa [#allocation6], 1
    %s242 = scalar_lea.sflag [#allocation6], 1
    %243 = vsyncpa %s242, 1
    %244 = vsyncpa [#allocation9], 1
    %s245 = scalar_lea.sflag [#allocation9], 1
    %246 = vsyncpa %s245, 1
    %247 = vsyncpa [#allocation7], 1
    %s248 = scalar_lea.sflag [#allocation7], 1
    %249 = vsyncpa %s248, 1

</llo_original>
